<compile_context>
chip_gen: v6e
topology: v6e:2x2x1
jax: 0.10.0
libtpu: 0.0.40
codegen_flags: <defaults>
</compile_context>

<pallas_src>
from functools import lru_cache, partial

import jax
import jax.numpy as jnp
from jax import lax
from jax.experimental import pallas as pl
from jax.experimental.pallas import tpu as pltpu


# --------------------------- hardware-aware budgets --------------------------- #

@lru_cache(maxsize=1)
def _hw_params():
    """(per-buffer tile budget, scoped VMEM limit, min parallel grid steps).

    Budget = 2 streams (in + out) x 2 pipeline buffers x tile:
      * v5e / v6e: 128 MiB VMEM, 1 TensorCore -> 8 MiB tiles, 64 MiB scoped,
        only ~2 steps needed to hide the pipeline prologue/epilogue.
      * v7x: 64 MiB VMEM, 2 TensorCores -> 4 MiB tiles, 32 MiB scoped,
        >= 4 parallel steps so the grid splits across both cores.
    """
    try:
        vmem_cap = int(pltpu.get_tpu_info().vmem_capacity_bytes)
    except Exception:
        vmem_cap = 64 << 20            # conservative (v7x-sized) default
    if vmem_cap > (64 << 20):          # v5e / v6e class parts
        tile_budget, vmem_limit = 8 << 20, 64 << 20
    else:                              # v7x class parts
        tile_budget, vmem_limit = 4 << 20, 32 << 20
    try:
        kind = jax.devices()[0].device_kind.lower()
    except Exception:
        kind = ""
    two_tc = any(tag in kind for tag in ("v4", "v5p", "v7", "7x"))
    min_steps = 4 if two_tc else 2
    return tile_budget, vmem_limit, min_steps


def _choose_td(D, slab_bytes, flip_d, tile_budget, min_steps, n_outer, sublane=1):
    """Per-block extent along D and the number of D blocks.

    Constraints:
      * td * slab_bytes <= tile_budget (double-buffered in + out fits VMEM).
      * flip_d: td must divide D so the mirrored block index stays block
        aligned (the in-block reversal handles the rest).  Without a D flip any
        td works: cdiv grid, ragged last block maps straight through.
      * sublane > 1 (fused (C, D, H*W) view): td must be a multiple of the
        dtype's sublane tile or the full extent ((8,128)-rule on block shapes).
    Returns (None, None) if no td satisfies the constraints.
    """
    max_td = max(1, min(D, tile_budget // max(slab_bytes, 1)))

    def ok(t):
        if flip_d and D % t:
            return False
        if sublane > 1 and t != D and t % sublane:
            return False
        return True

    def n_blocks(t):
        return D // t if flip_d else pl.cdiv(D, t)

    cands = [t for t in range(1, max_td + 1) if ok(t)]
    if not cands:
        return None, None
    # Largest block that still leaves enough parallel steps (pipeline + 2-TC
    # balance); if no candidate reaches the floor, keep the largest block.
    need_nd = pl.cdiv(min_steps, max(n_outer, 1))
    good = [t for t in cands if n_blocks(t) >= need_nd]
    td = max(good) if good else max(cands)
    return td, n_blocks(td)


# ------------------ primary path: native-dtype lax.rev flips ------------------ #

def _flip_block_kernel(x_ref, o_ref, *, rev_dims):
    """One VMEM block: reverse the requested in-block dims in native dtype."""
    x = x_ref[...]
    if rev_dims:
        x = lax.rev(x, rev_dims)       # XLU permutes; no MXU, no f32 round-trip
    o_ref[...] = x


def _run_flip(x, block_shape, in_map, out_map, rev_dims, grid, vmem_limit):
    nbytes = int(x.size) * jnp.dtype(x.dtype).itemsize
    return pl.pallas_call(
        partial(_flip_block_kernel, rev_dims=rev_dims),
        out_shape=jax.ShapeDtypeStruct(x.shape, x.dtype),
        grid_spec=pltpu.PrefetchScalarGridSpec(
            num_scalar_prefetch=0,
            grid=grid,
            in_specs=[pl.BlockSpec(block_shape, in_map)],
            out_specs=pl.BlockSpec(block_shape, out_map),
        ),
        compiler_params=pltpu.CompilerParams(
            dimension_semantics=("parallel", "parallel"),
            vmem_limit_bytes=vmem_limit),
        # Pure data movement: tell XLA this custom call is memory-bound.
        cost_estimate=pl.CostEstimate(
            flops=0, transcendentals=0, bytes_accessed=2 * nbytes),
    )(x)


def _flip_volume_rev(img, spatial_axis):
    C, D, H, W = img.shape
    flip_d = spatial_axis in (None, 0)
    flip_h = spatial_axis in (None, 1)
    flip_w = spatial_axis in (None, 2)
    itemsize = jnp.dtype(img.dtype).itemsize
    tile_budget, vmem_limit, min_steps = _hw_params()

    # D-only flip: fold H and W into one large lane-dense minor dim (pure
    # layout plumbing; unmasked vector stores even when W is not a multiple of
    # 128), with the mirrored D block index still carried by the index_map.
    if flip_d and not flip_h and not flip_w:
        M = H * W
        sublane = max(8, 32 // itemsize)      # f32: 8, bf16: 16, int8: 32
        td, n_d = _choose_td(D, M * itemsize, True, tile_budget, min_steps, C,
                             sublane=sublane)
        if td is not None:
            out = _run_flip(
                img.reshape(C, D, M),
                (None, td, M),
                lambda c, d: (c, n_d - 1 - d, 0),
                lambda c, d: (c, d, 0),
                (0,) if td > 1 else (),
                (C, n_d),
                vmem_limit)
            return out.reshape(C, D, H, W)
        # No tiling-friendly td for the fused view -> fall through to 4-D path.

    # General path: (C, D, H, W) blocks of several full (H, W) slabs; D flip via
    # mirrored block index + in-block reversal, H/W flips via in-block lax.rev.
    td, n_d = _choose_td(D, H * W * itemsize, flip_d, tile_budget, min_steps, C)
    rev_dims = tuple(ax for ax, f in enumerate(
        (flip_d and td > 1, flip_h, flip_w)) if f)
    # TODO(synk): if a single (H, W) slab ever exceeds the per-buffer tile
    # budget, block H as well; and if a divisor-poor D with a D flip leaves
    # tiny blocks while a full-D slab does not fit, a ragged mirrored-edge
    # scheme (pl.Element offsets) would be needed to keep blocks large.
    return _run_flip(
        img,
        (None, td, H, W),
        lambda c, d: (c, (n_d - 1 - d) if flip_d else d, 0, 0),
        lambda c, d: (c, d, 0, 0),
        rev_dims,
        (C, n_d),
        vmem_limit)


# ---------- compatibility fallback (only if lax.rev does not lower) ---------- #
# Same td-blocked DMA structure as the primary path.  The D flip is a native
# dtype in-block row copy (no MXU, no cast); only H/W flips use the MXU
# anti-identity trick.  NOTE: the f32 round-trip of the matmul path is lossy
# for integer volumes with magnitudes above 2**24 (the lax.rev path is exact).

def _flip_block_kernel_mxu(*refs, td, flip_d, flip_h, flip_w):
    it = iter(refs)
    x_ref = next(it)
    rh_ref = next(it) if flip_h else None
    rw_ref = next(it) if flip_w else None
    o_ref = next(it)

    def body(i, carry):
        j = (td - 1 - i) if flip_d else i
        x = x_ref[i]                                   # (H, W) slab
        if flip_h or flip_w:
            xf = x.astype(jnp.float32)
            if flip_w:                                 # reverse lanes:   X @ R_W
                xf = jnp.dot(xf, rw_ref[...], preferred_element_type=jnp.float32)
            if flip_h:                                 # reverse sublanes: R_H @ X
                xf = jnp.dot(rh_ref[...], xf, preferred_element_type=jnp.float32)
            o_ref[j] = xf.astype(o_ref.dtype)
        else:                                          # D-only: native-dtype copy
            o_ref[j] = x
        return carry

    lax.fori_loop(0, td, body, 0)


def _flip_volume_mxu(img, spatial_axis):
    C, D, H, W = img.shape
    flip_d = spatial_axis in (None, 0)
    flip_h = spatial_axis in (None, 1)
    flip_w = spatial_axis in (None, 2)
    itemsize = jnp.dtype(img.dtype).itemsize
    tile_budget, vmem_limit, min_steps = _hw_params()
    td, n_d = _choose_td(D, H * W * itemsize, flip_d, tile_budget, min_steps, C)

    in_specs = [pl.BlockSpec(
        (None, td, H, W),
        lambda c, d: (c, (n_d - 1 - d) if flip_d else d, 0, 0))]
    args = [img]
    if flip_h:
        in_specs.append(pl.BlockSpec((H, H), lambda c, d: (0, 0)))
        args.append(jnp.flip(jnp.eye(H, dtype=jnp.float32), axis=1))
    if flip_w:
        in_specs.append(pl.BlockSpec((W, W), lambda c, d: (0, 0)))
        args.append(jnp.flip(jnp.eye(W, dtype=jnp.float32), axis=1))

    nbytes = int(img.size) * itemsize
    flops = 2 * int(img.size) * ((H if flip_h else 0) + (W if flip_w else 0))
    return pl.pallas_call(
        partial(_flip_block_kernel_mxu, td=td,
                flip_d=flip_d, flip_h=flip_h, flip_w=flip_w),
        out_shape=jax.ShapeDtypeStruct((C, D, H, W), img.dtype),
        grid_spec=pltpu.PrefetchScalarGridSpec(
            num_scalar_prefetch=0,
            grid=(C, n_d),
            in_specs=in_specs,
            out_specs=pl.BlockSpec((None, td, H, W), lambda c, d: (c, d, 0, 0)),
        ),
        compiler_params=pltpu.CompilerParams(
            dimension_semantics=("parallel", "parallel"),
            vmem_limit_bytes=vmem_limit),
        cost_estimate=pl.CostEstimate(
            flops=flops, transcendentals=0, bytes_accessed=2 * nbytes),
    )(*args)


@lru_cache(maxsize=None)
def _rev_supported(dtype_name):
    """Tiny, cached, per-dtype probe: does lax.rev lower in a Pallas TPU kernel?

    Deliberately broad catch: the probe is 64 KiB (no OOM risk), and any failure
    to lower/execute rev must route to the fallback rather than crash.
    TODO(synk): drop the probe + MXU fallback once lax.rev support can be
    assumed on every deployed Mosaic toolchain.
    """
    def _probe(x_ref, o_ref):
        o_ref[...] = lax.rev(x_ref[...], (0, 1, 2))

    x = jnp.zeros((8, 16, 128), jnp.dtype(dtype_name))
    try:
        jax.block_until_ready(
            pl.pallas_call(_probe, out_shape=jax.ShapeDtypeStruct(x.shape, x.dtype))(x))
        return True
    except Exception:
        return False


def flip_volume(img, spatial_axis):
    """np.flip(img, map_spatial_axes(img.ndim, spatial_axis)) for a (C,D,H,W) volume."""
    if _rev_supported(jnp.dtype(img.dtype).name):
        return _flip_volume_rev(img, spatial_axis)
    return _flip_volume_mxu(img, spatial_axis)


# ------------------------------ point-cloud flip ------------------------------ #

def flip_pc(pc, spatial_axis):
    # The (N, 3) elementwise flip stays in plain XLA: a dedicated pallas_call is
    # dominated by launch/DMA fixed costs and the 3-wide minor dim would force
    # masked (vst.msk) stores.
    # TODO(synk): the open3d rotation branch in the reference is dead code
    # (rotation_angle is always None), so it is intentionally not implemented.
    if spatial_axis is None:
        return 1.0 - pc
    if spatial_axis == 0:
        return pc.at[:, 0].set(1.0 - pc[:, 0])
    if spatial_axis == 1:
        return pc.at[:, 0:2].set(1.0 - pc[:, 0:2])
    return pc.at[:, 1:3].set(1.0 - pc[:, 1:3])


# -------------------------------- module API -------------------------------- #

def flip_forward(img, pc, spatial_axis=None):
    """Equivalent of Flip(spatial_axis).forward(img, pc)."""
    assert spatial_axis in (None, 0, 1, 2), \
        "Unaccepted value provided for the spatial axis"
    return flip_volume(img, spatial_axis), flip_pc(pc, spatial_axis)


# --------------------------------- reference --------------------------------- #

def flip_reference(img, pc, spatial_axis):
    axes = tuple(range(1, img.ndim)) if spatial_axis is None else (spatial_axis + 1,)
    img_f = jnp.flip(img, axes)
    if spatial_axis is None:
        pc_f = 1.0 - pc
    elif spatial_axis == 0:
        pc_f = pc.at[:, 0].set(1.0 - pc[:, 0])
    elif spatial_axis == 1:
        pc_f = pc.at[:, 0:2].set(1.0 - pc[:, 0:2])
    else:
        pc_f = pc.at[:, 1:3].set(1.0 - pc[:, 1:3])
    return img_f, pc_f


if __name__ == "__main__":
    key = jax.random.PRNGKey(0)
    k1, k2, k3 = jax.random.split(key, 3)

    N_POINTS = 8
    pc = jax.random.uniform(k3, (N_POINTS, 3), dtype=jnp.float32)

    # Small channel-first 3-D volumes (lane-dense W; second shape has an odd
    # channel count and a non-power-of-two depth to exercise the tiling policy).
    vol_a = jax.random.normal(k1, (2, 16, 16, 256), dtype=jnp.float32)
    vol_b = jax.random.normal(k2, (3, 10, 24, 128), dtype=jnp.float32)

    for img in (vol_a, vol_a.astype(jnp.bfloat16), vol_b):
        for axis in (None, 0, 1, 2):
            out_img, out_pc = flip_forward(img, pc, axis)
            jax.block_until_ready(out_img)
            jax.block_until_ready(out_pc)
            ref_img, ref_pc = flip_reference(img, pc, axis)
            assert out_img.dtype == img.dtype
            assert out_img.shape == img.shape
            assert jnp.array_equal(out_img, ref_img), \
                f"volume mismatch (axis={axis}, shape={img.shape}, dtype={img.dtype})"
            assert jnp.allclose(out_pc, ref_pc), f"point-cloud mismatch (axis={axis})"

    print("KERNEL_OK")
</pallas_src>

<mosaic_0001>
module attributes {stable_mosaic.version = 11 : i64} {
  func.func @_flip_block_kernel_mxu(%arg0: i32, %arg1: i32, %arg2: memref<1x16x16x256xf32, #tpu.memory_space<vmem>>, %arg3: memref<16x16xf32, #tpu.memory_space<vmem>>, %arg4: memref<256x256xf32, #tpu.memory_space<vmem>>, %arg5: memref<1x16x16x256xf32, #tpu.memory_space<vmem>>) attributes {dimension_semantics = [#tpu.dimension_semantics<parallel>, #tpu.dimension_semantics<parallel>], iteration_bounds = array<i64: 2, 1>, scalar_prefetch = 0 : i64, scratch_operands = 0 : i64, tpu.core_type = #tpu.core_type<tc>, window_params = [{transform_indices = @transform_0, window_bounds = array<i64: 1, 16, 16, 256>}, {pipeline_mode = #tpu.pipeline_mode<synchronous>, transform_indices = @transform_1, window_bounds = array<i64: 16, 16>}, {pipeline_mode = #tpu.pipeline_mode<synchronous>, transform_indices = @transform_2, window_bounds = array<i64: 256, 256>}, {transform_indices = @transform_3, window_bounds = array<i64: 1, 16, 16, 256>}]} {
    %c0_i32 = arith.constant 0 : i32
    %c16_i32 = arith.constant 16 : i32
    %0 = arith.addi %c0_i32, %c16_i32 : i32
    %c1_i32 = arith.constant 1 : i32
    scf.for %arg6 = %c0_i32 to %0 step %c1_i32  : i32 {
      %c15_i32 = arith.constant 15 : i32
      %1 = arith.subi %c15_i32, %arg6 : i32
      %c0 = arith.constant 0 : index
      %2 = arith.index_cast %arg6 : i32 to index
      %c0_1 = arith.constant 0 : index
      %c0_2 = arith.constant 0 : index
      %3 = vector.load %arg2[%c0, %2, %c0_1, %c0_2] : memref<1x16x16x256xf32, #tpu.memory_space<vmem>>, vector<1x1x16x256xf32>
      %4 = vector.shape_cast %3 : vector<1x1x16x256xf32> to vector<16x256xf32>
      %c0_3 = arith.constant 0 : index
      %c0_4 = arith.constant 0 : index
      %5 = vector.load %arg4[%c0_3, %c0_4] : memref<256x256xf32, #tpu.memory_space<vmem>>, vector<256x256xf32>
      %cst = arith.constant dense<0.000000e+00> : vector<16x256xf32>
      %6 = tpu.matmul %4, %5, %cst {dimension_numbers = #tpu.dot_dimension_numbers<[1], [0], [0], [1], [0, 0, 1, 1], [], []>} : vector<16x256xf32>, vector<256x256xf32>, vector<16x256xf32> -> vector<16x256xf32>
      %c0_5 = arith.constant 0 : index
      %c0_6 = arith.constant 0 : index
      %7 = vector.load %arg3[%c0_5, %c0_6] : memref<16x16xf32, #tpu.memory_space<vmem>>, vector<16x16xf32>
      %cst_7 = arith.constant dense<0.000000e+00> : vector<16x256xf32>
      %8 = tpu.matmul %7, %6, %cst_7 {dimension_numbers = #tpu.dot_dimension_numbers<[1], [0], [0], [1], [0, 0, 1, 1], [], []>} : vector<16x16xf32>, vector<16x256xf32>, vector<16x256xf32> -> vector<16x256xf32>
      %c0_8 = arith.constant 0 : index
      %9 = arith.index_cast %1 : i32 to index
      %c0_9 = arith.constant 0 : index
      %c0_10 = arith.constant 0 : index
      %10 = vector.load %arg5[%c0_8, %9, %c0_9, %c0_10] : memref<1x16x16x256xf32, #tpu.memory_space<vmem>>, vector<1x1x16x256xf32>
      %11 = vector.shape_cast %10 : vector<1x1x16x256xf32> to vector<16x256xf32>
      %12 = vector.shape_cast %8 : vector<16x256xf32> to vector<1x1x16x256xf32>
      tpu.vector_store %arg5[%c0_8, %9, %c0_9, %c0_10], %12 {strides = array<i32>} : memref<1x16x16x256xf32, #tpu.memory_space<vmem>>, vector<1x1x16x256xf32>,
    }
    %c16_i32_0 = arith.constant 16 : i32
    return
  }
  func.func @transform_0(%arg0: i32, %arg1: i32) -> (i32, i32, i32, i32) {
    %c0_i32 = arith.constant 0 : i32
    %0 = arith.subi %c0_i32, %arg1 : i32
    %c0_i32_0 = arith.constant 0 : i32
    %c0_i32_1 = arith.constant 0 : i32
    %c0_i32_2 = arith.constant 0 : i32
    return %arg0, %0, %c0_i32_0, %c0_i32_1 : i32, i32, i32, i32
  }
  func.func @transform_1(%arg0: i32, %arg1: i32) -> (i32, i32) {
    %c0_i32 = arith.constant 0 : i32
    %c0_i32_0 = arith.constant 0 : i32
    %c0_i32_1 = arith.constant 0 : i32
    return %c0_i32, %c0_i32_0 : i32, i32
  }
  func.func @transform_2(%arg0: i32, %arg1: i32) -> (i32, i32) {
    %c0_i32 = arith.constant 0 : i32
    %c0_i32_0 = arith.constant 0 : i32
    %c0_i32_1 = arith.constant 0 : i32
    return %c0_i32, %c0_i32_0 : i32, i32
  }
  func.func @transform_3(%arg0: i32, %arg1: i32) -> (i32, i32, i32, i32) {
    %c0_i32 = arith.constant 0 : i32
    %c0_i32_0 = arith.constant 0 : i32
    %c0_i32_1 = arith.constant 0 : i32
    return %arg0, %arg1, %c0_i32, %c0_i32_0 : i32, i32, i32, i32
  }
}

</mosaic_0001>

<llo_original>
// kernel: tpu_custom_call.1
$region0: #{tpu_custom_call.1}
  #allocation0 [shape = 'u32[]', space=smem, size = 0x4, offset = 0x4, fixed_abs, tag = 'smem constant byte address 0x4 - core index']
  #allocation1 [shape = 'u32[144,128]{1,0:T(1,128)}', space=vmem, size = 0x12000, scoped, tag = 'internal scratch']
  %s0 = inlined_call_operand.hbm [shape: f32[2,16,16,256], index: 0, kind: input, shape index: {}]
  %s1 = inlined_call_operand.hbm [shape: f32[16,16], index: 1, kind: input, shape index: {}]
  %s2 = inlined_call_operand.hbm [shape: f32[256,256], index: 2, kind: input, shape index: {}]
  %s3 = inlined_call_operand.hbm [shape: f32[2,16,16,256], index: 3, kind: output, shape index: {}]
  %s4 = sld [smem:[#allocation0]]
  $region64: #{tpu_custom_call.1} parent=0
    _
  %s6 = ssub.s32 1, %s4
  %s7 = scalar_select 0, %s6, %s4
  $region1: #{tpu_custom_call.1} parent=0
    #allocation2 [shape = 'u8[524288]{0}', space=vmem, size = 0x80000, scoped, tag = 'input window, operand 0']
    #allocation3 [shape = 's32[2]{0}', space=sflag, size = 0x8, scoped, tag = 'scoped memory for tpu_custom_call.1']
    #allocation4 [shape = 's32[2]{0}', space=sflag, size = 0x8, scoped, tag = 'scoped memory for tpu_custom_call.1']
    #allocation5 [shape = 'u8[8192]{0}', space=vmem, size = 0x2000, scoped, tag = 'input window, operand 1, single buffered']
    #allocation6 [shape = 's32[1]{0}', space=sflag, size = 0x4, scoped, tag = 'scoped memory for tpu_custom_call.1']
    #allocation7 [shape = 'u8[262144]{0}', space=vmem, size = 0x40000, scoped, tag = 'input window, operand 2, single buffered']
    #allocation8 [shape = 'u8[524288]{0}', space=vmem, size = 0x80000, scoped, tag = 'output window, operand 0']
    %8 = vsyncpa [#allocation3], 0
    %s9 = scalar_lea.sflag [#allocation3], 1
    %10 = vsyncpa %s9, 0
    %11 = vsyncpa [#allocation6], 0
    %12 = vsyncpa [#allocation4], 0
    %s13 = scalar_lea.sflag [#allocation4], 1
    %14 = vsyncpa %s13, 0
    loop: start=0, step=1, limit=4
    $region2: #{tpu_custom_call.1} parent=1 // loop_pre_header
      _
    $region3: #{tpu_custom_call.1} parent=1 // loop_header
      %s16 = sphi 0, %s20
      %p17 = scmp.ge.s32.totalorder %s16, 4
      %s23 = sphi 0, %s35
      %s24 = sphi 0, %s31
      %s25 = sphi 0, %s23
      %s26 = sphi 0, %s24
      %s27 = sphi 0, %s25
      %s28 = sphi 0, %s26
      %s42 = sphi 0, %s44
      %s45 = sphi 0, %s42
      %s46 = sphi 0, %s45
      %s62 = sphi 0, %s46
      %s66 = sphi 0, %s66
      %s68 = sphi 0, %s66
      %s69 = sphi 0, %s68
      %s83 = sphi 0, %s69
      %s87 = sphi 0, %s87
      %s89 = sphi 0, %s87
      %s90 = sphi 0, %s89
      %s104 = sphi 0, %s90
      %s112 = sphi 0, %s114
      %s115 = sphi 0, %s112
      %s116 = sphi 0, %s115
      %s132 = sphi 0, %s116
    $region4: #{tpu_custom_call.1} parent=1 // loop_header_branch
      %19 = sbr.rel (%p17) target = $region8
    $region5: #{tpu_custom_call.1} parent=1 // loop_body
      %s21 = ssub.s32 %s16, 1
      %s22 = ssub.s32 %s16, 2
      %s29 = sadd.s32 1, %s24
      %p30 = scmp.ge.s32.totalorder %s29, 1
      %s31 = scalar_select %p30, 0, %s29
      %s32 = sadd.s32 1, %s23
      %s33 = scalar_select %p30, %s32, %s23
      %p34 = scmp.ge.s32.totalorder %s33, 2
      %s35 = scalar_select %p34, 0, %s33
      %s36 = ssub.s32 0, %s24
      %s37 = ssub.s32 0, %s31
      %s38 = ssub.s32 %s23, %s35
      %s39 = ssub.s32 %s36, %s37
      %s40 = sor.u32 %s38, %s39
      %p41 = scmp.eq.s32.totalorder %s40, 0
      %s43 = sadd.s32 %s42, 1
      %s44 = scalar_select %p41, %s42, %s43
      %p47 = pneg %p41
      %p48 = scmp.eq.s32.totalorder %s16, 1
      %p49 = por %p47, %p48
      %p50 = scmp.ne.s32.totalorder %s42, %s45
      %p51 = scmp.eq.s32.totalorder %s16, 0
      %p52 = por %p50, %p51
      %p53 = scmp.ne.s32.totalorder %s42, %s45
      %p54 = scmp.eq.s32.totalorder %s21, 1
      %p55 = por %p53, %p54
      %p56 = scmp.ne.s32.totalorder %s45, %s46
      %p57 = scmp.eq.s32.totalorder %s21, 0
      %p58 = por %p56, %p57
      %p59 = scmp.ne.s32.totalorder %s45, %s46
      %p60 = scmp.eq.s32.totalorder %s22, 1
      %p61 = por %p59, %p60
      %p63 = scmp.ne.s32.totalorder %s46, %s62
      %p64 = scmp.eq.s32.totalorder %s22, 0
      %p65 = por %p63, %p64
      %s67 = sadd.s32 %s66, 1
      %p70 = scmp.eq.s32.totalorder %s16, 1
      %p71 = scmp.ne.s32.totalorder %s66, %s68
      %p72 = scmp.eq.s32.totalorder %s16, 0
      %p73 = por %p71, %p72
      %p74 = scmp.ne.s32.totalorder %s66, %s68
      %p75 = scmp.eq.s32.totalorder %s21, 1
      %p76 = por %p74, %p75
      %p77 = scmp.ne.s32.totalorder %s68, %s69
      %p78 = scmp.eq.s32.totalorder %s21, 0
      %p79 = por %p77, %p78
      %p80 = scmp.ne.s32.totalorder %s68, %s69
      %p81 = scmp.eq.s32.totalorder %s22, 1
      %p82 = por %p80, %p81
      %p84 = scmp.ne.s32.totalorder %s69, %s83
      %p85 = scmp.eq.s32.totalorder %s22, 0
      %p86 = por %p84, %p85
      %s88 = sadd.s32 %s87, 1
      %p91 = scmp.eq.s32.totalorder %s16, 1
      %p92 = scmp.ne.s32.totalorder %s87, %s89
      %p93 = scmp.eq.s32.totalorder %s16, 0
      %p94 = por %p92, %p93
      %p95 = scmp.ne.s32.totalorder %s87, %s89
      %p96 = scmp.eq.s32.totalorder %s21, 1
      %p97 = por %p95, %p96
      %p98 = scmp.ne.s32.totalorder %s89, %s90
      %p99 = scmp.eq.s32.totalorder %s21, 0
      %p100 = por %p98, %p99
      %p101 = scmp.ne.s32.totalorder %s89, %s90
      %p102 = scmp.eq.s32.totalorder %s22, 1
      %p103 = por %p101, %p102
      %p105 = scmp.ne.s32.totalorder %s90, %s104
      %p106 = scmp.eq.s32.totalorder %s22, 0
      %p107 = por %p105, %p106
      %s108 = ssub.s32 %s23, %s35
      %s109 = ssub.s32 %s24, %s31
      %s110 = sor.u32 %s108, %s109
      %p111 = scmp.eq.s32.totalorder %s110, 0
      %s113 = sadd.s32 %s112, 1
      %s114 = scalar_select %p111, %s112, %s113
      %p117 = pneg %p111
      %p118 = scmp.eq.s32.totalorder %s16, 1
      %p119 = por %p117, %p118
      %p120 = scmp.ne.s32.totalorder %s112, %s115
      %p121 = scmp.eq.s32.totalorder %s16, 0
      %p122 = por %p120, %p121
      %p123 = scmp.ne.s32.totalorder %s112, %s115
      %p124 = scmp.eq.s32.totalorder %s21, 1
      %p125 = por %p123, %p124
      %p126 = scmp.ne.s32.totalorder %s115, %s116
      %p127 = scmp.eq.s32.totalorder %s21, 0
      %p128 = por %p126, %p127
      %p129 = scmp.ne.s32.totalorder %s115, %s116
      %p130 = scmp.eq.s32.totalorder %s22, 1
      %p131 = por %p129, %p130
      %p133 = scmp.ne.s32.totalorder %s116, %s132
      %p134 = scmp.eq.s32.totalorder %s22, 0
      %p135 = por %p133, %p134
      %p136 = scmp.le.s32.totalorder 1, %s16
      %p137 = scmp.lt.s32.totalorder %s16, 3
      %p138 = pnand %p136, %p137
      %p139 = pneg %p138
      // Predicated region
      $region9: #{tpu_custom_call.1} parent=5 // pred_check
        _
      $region10: #{tpu_custom_call.1} parent=5 // pred_check_branch
        %141 = sbr.rel (%p138) target = $region12
      $region11: #{tpu_custom_call.1} parent=5 // pred_region
        %s142 = ssub.s32 %s16, 1
        // Predicated region
        $region13: #{tpu_custom_call.1} parent=11 // pred_check
          %p143 = pneg %p79
        $region14: #{tpu_custom_call.1} parent=11 // pred_check_branch
          %145 = sbr.rel (%p143) target = $region16
        $region15: #{tpu_custom_call.1} parent=11 // pred_region
          %s147 = ssub.s32 256, 256
          %148 = vsyncadd [#allocation6], %s147
          %s149 = sshll.u32 [#allocation5], 4
          %s150 = int_to_ptr.vmem [resolvable:$true] %s149
          %155 = dma.hbm_to_vmem [thread:$0]  %s1, 256, %s150, [#allocation6], 128, 128, 8
        $region16: #{tpu_custom_call.1} parent=11 // pred_fallthru
          _
        // Predicated region
        $region17: #{tpu_custom_call.1} parent=11 // pred_check
          %p156 = pneg %p100
        $region18: #{tpu_custom_call.1} parent=11 // pred_check_branch
          %158 = sbr.rel (%p156) target = $region20
        $region19: #{tpu_custom_call.1} parent=11 // pred_region
          %s160 = ssub.s32 8192, 8192
          %161 = vsyncadd [#allocation6], %s160
          %s162 = sshll.u32 [#allocation7], 4
          %s163 = int_to_ptr.vmem [resolvable:$true] %s162
          %168 = dma.hbm_to_vmem [thread:$0]  %s2, 8192, %s163, [#allocation6], 256, 256, 16
        $region20: #{tpu_custom_call.1} parent=11 // pred_fallthru
          _
      $region12: #{tpu_custom_call.1} parent=5 // pred_fallthru
        _
      %p169 = scmp.lt.s32.totalorder %s16, 2
      // Predicated region
      $region21: #{tpu_custom_call.1} parent=5 // pred_check
        %p170 = pneg %p169
      $region22: #{tpu_custom_call.1} parent=5 // pred_check_branch
        %172 = sbr.rel (%p170) target = $region24
      $region23: #{tpu_custom_call.1} parent=5 // pred_region
        // Predicated region
        $region25: #{tpu_custom_call.1} parent=23 // pred_check
          %p173 = pneg %p52
        $region26: #{tpu_custom_call.1} parent=23 // pred_check_branch
          %175 = sbr.rel (%p173) target = $region28
        $region27: #{tpu_custom_call.1} parent=23 // pred_region
          %s176 = sand.u32 %s42, 1
          %s177 = scalar_lea.sflag [#allocation3], %s176
          %s178 = sand.u32 %s42, 1
          %s179 = smul.addr %s178, 512
          %s180 = scalar_lea.vmem [#allocation2], %s179
          %s181 = ssub.s32 0, %s24
          %s182 = smul.u32 16, %s181
          %s184 = ssub.s32 8192, 8192
          %185 = vsyncadd %s177, %s184
          %s186 = smul.addr %s182, 4
          %s187 = smul.addr %s23, 64
          %s188 = sadd.s32 %s186, %s187
          %s189 = smul.addr %s188, 128
          %s190 = scalar_lea.hbm %s0, %s189
          %s191 = sshll.u32 %s180, 4
          %s192 = int_to_ptr.vmem [resolvable:$true] %s191
          %197 = dma.hbm_to_vmem [thread:$0]  %s190, 8192, %s192, %s177, 256, 256, 16
        $region28: #{tpu_custom_call.1} parent=23 // pred_fallthru
          _
      $region24: #{tpu_custom_call.1} parent=5 // pred_fallthru
        _
      %p198 = scmp.le.s32.totalorder 1, %s16
      %p199 = scmp.lt.s32.totalorder %s16, 3
      %p200 = pnand %p198, %p199
      %p201 = pneg %p200
      // Predicated region
      $region29: #{tpu_custom_call.1} parent=5 // pred_check
        _
      $region30: #{tpu_custom_call.1} parent=5 // pred_check_branch
        %203 = sbr.rel (%p200) target = $region32
      $region31: #{tpu_custom_call.1} parent=5 // pred_region
        %s204 = ssub.s32 %s16, 1
        %s205 = sand.u32 %s45, 1
        %s206 = scalar_lea.sflag [#allocation3], %s205
        %s207 = sand.u32 %s45, 1
        %s208 = smul.addr %s207, 512
        %s209 = scalar_lea.vmem [#allocation2], %s208
        // Predicated region
        $region33: #{tpu_custom_call.1} parent=31 // pred_check
          %p210 = pneg %p58
        $region34: #{tpu_custom_call.1} parent=31 // pred_check_branch
          %212 = sbr.rel (%p210) target = $region36
        $region35: #{tpu_custom_call.1} parent=31 // pred_region
          %213 = dma.done %s206, 8192
        $region36: #{tpu_custom_call.1} parent=31 // pred_fallthru
          _
        // Predicated region
        $region37: #{tpu_custom_call.1} parent=31 // pred_check
          %p214 = pneg %p79
        $region38: #{tpu_custom_call.1} parent=31 // pred_check_branch
          %216 = sbr.rel (%p214) target = $region40
        $region39: #{tpu_custom_call.1} parent=31 // pred_region
          %217 = dma.done [#allocation6], 256
        $region40: #{tpu_custom_call.1} parent=31 // pred_fallthru
          _
        // Predicated region
        $region41: #{tpu_custom_call.1} parent=31 // pred_check
          %p218 = pneg %p100
        $region42: #{tpu_custom_call.1} parent=31 // pred_check_branch
          %220 = sbr.rel (%p218) target = $region44
        $region43: #{tpu_custom_call.1} parent=31 // pred_region
          %221 = dma.done [#allocation6], 8192
        $region44: #{tpu_custom_call.1} parent=31 // pred_fallthru
          _
        %s222 = sand.u32 %s45, 1
        %s223 = scalar_lea.sflag [#allocation3], %s222
        %s224 = sand.u32 %s45, 1
        %s225 = smul.addr %s224, 512
        %s226 = scalar_lea.vmem [#allocation2], %s225
        %p227 = pneg %p58
        %p228 = pneg %p55
        %p229 = pneg %p79
        %p230 = pneg %p76
        %p231 = pneg %p100
        %p232 = pneg %p97
        %p233 = pneg %p128
        %p234 = pneg %p125
        %s235 = sand.u32 %s115, 1
        %s236 = scalar_lea.sflag [#allocation4], %s235
        %s237 = sand.u32 %s115, 1
        %s238 = smul.addr %s237, 512
        %s239 = scalar_lea.vmem [#allocation8], %s238
        %s240 = ssub.s32 0, %s26
        %s241 = smul.u32 16, %s240
        %s242 = smul.u32 16, %s26
        loop: start=0, step=1, limit=16
        $region45: #{tpu_custom_call.1} parent=31 // loop_pre_header
          _
        $region46: #{tpu_custom_call.1} parent=31 // loop_header
          %s244 = sphi 0, %s248
          %p245 = scmp.ge.s32.totalorder %s244, 16
        $region47: #{tpu_custom_call.1} parent=31 // loop_header_branch
          %247 = sbr.rel (%p245) target = $region51
        $region48: #{tpu_custom_call.1} parent=31 // loop_body
          %s249 = ssub.s32 15, %s244
          %s250 = smul.u32 %s244, 4
          %s251 = smul.addr %s250, 8
          %s252 = scalar_lea.vmem %s209, %s251 [#allocation2]
          %v253 = vld [vmem:[%s252] sm:$0xff]
          %v254 = vld [vmem:[%s252 + $0x8] sm:$0xff]
          %v255 = vld [vmem:[%s252 + $0x10] sm:$0xff]
          %v256 = vld [vmem:[%s252 + $0x18] sm:$0xff]
          %v257 = vld [vmem:[#allocation7] sm:$0xff]
          %v258 = vld [vmem:[#allocation7 + $0x8] sm:$0xff]
          %v259 = vld [vmem:[#allocation7 + $0x10] sm:$0xff]
          %v260 = vld [vmem:[#allocation7 + $0x18] sm:$0xff]
          %v261 = vld [vmem:[#allocation7 + $0x20] sm:$0xff]
          %v262 = vld [vmem:[#allocation7 + $0x28] sm:$0xff]
          %v263 = vld [vmem:[#allocation7 + $0x30] sm:$0xff]
          %v264 = vld [vmem:[#allocation7 + $0x38] sm:$0xff]
          %v265 = vld [vmem:[#allocation7 + $0x40] sm:$0xff]
          %v266 = vld [vmem:[#allocation7 + $0x48] sm:$0xff]
          %v267 = vld [vmem:[#allocation7 + $0x50] sm:$0xff]
          %v268 = vld [vmem:[#allocation7 + $0x58] sm:$0xff]
          %v269 = vld [vmem:[#allocation7 + $0x60] sm:$0xff]
          %v270 = vld [vmem:[#allocation7 + $0x68] sm:$0xff]
          %v271 = vld [vmem:[#allocation7 + $0x70] sm:$0xff]
          %v272 = vld [vmem:[#allocation7 + $0x78] sm:$0xff]
          %v273 = vld [vmem:[#allocation7 + $0x80] sm:$0xff]
          %v274 = vld [vmem:[#allocation7 + $0x88] sm:$0xff]
          %v275 = vld [vmem:[#allocation7 + $0x90] sm:$0xff]
          %v276 = vld [vmem:[#allocation7 + $0x98] sm:$0xff]
          %v277 = vld [vmem:[#allocation7 + $0xa0] sm:$0xff]
          %v278 = vld [vmem:[#allocation7 + $0xa8] sm:$0xff]
          %v279 = vld [vmem:[#allocation7 + $0xb0] sm:$0xff]
          %v280 = vld [vmem:[#allocation7 + $0xb8] sm:$0xff]
          %v281 = vld [vmem:[#allocation7 + $0xc0] sm:$0xff]
          %v282 = vld [vmem:[#allocation7 + $0xc8] sm:$0xff]
          %v283 = vld [vmem:[#allocation7 + $0xd0] sm:$0xff]
          %v284 = vld [vmem:[#allocation7 + $0xd8] sm:$0xff]
          %v285 = vld [vmem:[#allocation7 + $0xe0] sm:$0xff]
          %v286 = vld [vmem:[#allocation7 + $0xe8] sm:$0xff]
          %v287 = vld [vmem:[#allocation7 + $0xf0] sm:$0xff]
          %v288 = vld [vmem:[#allocation7 + $0xf8] sm:$0xff]
          %v289 = vld [vmem:[#allocation7 + $0x100] sm:$0xff]
          %v290 = vld [vmem:[#allocation7 + $0x108] sm:$0xff]
          %v291 = vld [vmem:[#allocation7 + $0x110] sm:$0xff]
          %v292 = vld [vmem:[#allocation7 + $0x118] sm:$0xff]
          %v293 = vld [vmem:[#allocation7 + $0x120] sm:$0xff]
          %v294 = vld [vmem:[#allocation7 + $0x128] sm:$0xff]
          %v295 = vld [vmem:[#allocation7 + $0x130] sm:$0xff]
          %v296 = vld [vmem:[#allocation7 + $0x138] sm:$0xff]
          %v297 = vld [vmem:[#allocation7 + $0x140] sm:$0xff]
          %v298 = vld [vmem:[#allocation7 + $0x148] sm:$0xff]
          %v299 = vld [vmem:[#allocation7 + $0x150] sm:$0xff]
          %v300 = vld [vmem:[#allocation7 + $0x158] sm:$0xff]
          %v301 = vld [vmem:[#allocation7 + $0x160] sm:$0xff]
          %v302 = vld [vmem:[#allocation7 + $0x168] sm:$0xff]
          %v303 = vld [vmem:[#allocation7 + $0x170] sm:$0xff]
          %v304 = vld [vmem:[#allocation7 + $0x178] sm:$0xff]
          %v305 = vld [vmem:[#allocation7 + $0x180] sm:$0xff]
          %v306 = vld [vmem:[#allocation7 + $0x188] sm:$0xff]
          %v307 = vld [vmem:[#allocation7 + $0x190] sm:$0xff]
          %v308 = vld [vmem:[#allocation7 + $0x198] sm:$0xff]
          %v309 = vld [vmem:[#allocation7 + $0x1a0] sm:$0xff]
          %v310 = vld [vmem:[#allocation7 + $0x1a8] sm:$0xff]
          %v311 = vld [vmem:[#allocation7 + $0x1b0] sm:$0xff]
          %v312 = vld [vmem:[#allocation7 + $0x1b8] sm:$0xff]
          %v313 = vld [vmem:[#allocation7 + $0x1c0] sm:$0xff]
          %v314 = vld [vmem:[#allocation7 + $0x1c8] sm:$0xff]
          %v315 = vld [vmem:[#allocation7 + $0x1d0] sm:$0xff]
          %v316 = vld [vmem:[#allocation7 + $0x1d8] sm:$0xff]
          %v317 = vld [vmem:[#allocation7 + $0x1e0] sm:$0xff]
          %v318 = vld [vmem:[#allocation7 + $0x1e8] sm:$0xff]
          %v319 = vld [vmem:[#allocation7 + $0x1f0] sm:$0xff]
          %v320 = vld [vmem:[#allocation7 + $0x1f8] sm:$0xff]
          %321 = vmatprep.subr.mxu0 %v288
          %322 = vmatpush1.msra.mxu0 %v287
          %323 = vmatprep.subr.mxu0 %v286
          %324 = vmatpush1.msra.mxu0 %v285
          %325 = vmatprep.subr.mxu0 %v284
          %326 = vmatpush1.msra.mxu0 %v283
          %327 = vmatprep.subr.mxu0 %v282
          %328 = vmatpush1.msra.mxu0 %v281
          %329 = vmatprep.subr.mxu0 %v280
          %330 = vmatpush1.msra.mxu0 %v279
          %331 = vmatprep.subr.mxu0 %v278
          %332 = vmatpush1.msra.mxu0 %v277
          %333 = vmatprep.subr.mxu0 %v276
          %334 = vmatpush1.msra.mxu0 %v275
          %335 = vmatprep.subr.mxu0 %v274
          %336 = vmatpush1.msra.mxu0 %v273
          %337 = vmatprep.subr.mxu0 %v272
          %338 = vmatpush1.msra.mxu0 %v271
          %339 = vmatprep.subr.mxu0 %v270
          %340 = vmatpush1.msra.mxu0 %v269
          %341 = vmatprep.subr.mxu0 %v268
          %342 = vmatpush1.msra.mxu0 %v267
          %343 = vmatprep.subr.mxu0 %v266
          %344 = vmatpush1.msra.mxu0 %v265
          %345 = vmatprep.subr.mxu0 %v264
          %346 = vmatpush1.msra.mxu0 %v263
          %347 = vmatprep.subr.mxu0 %v262
          %348 = vmatpush1.msra.mxu0 %v261
          %349 = vmatprep.subr.mxu0 %v260
          %350 = vmatpush1.msra.mxu0 %v259
          %351 = vmatprep.subr.mxu0 %v258
          %352 = vmatpush1.msra.mxu0 %v257
          %353 = vmatprep.subr.mxu0 %v320
          %354 = vmatpush2.msra.mxu0 %v319
          %355 = vmatprep.subr.mxu0 %v318
          %356 = vmatpush2.msra.mxu0 %v317
          %357 = vmatprep.subr.mxu0 %v316
          %358 = vmatpush2.msra.mxu0 %v315
          %359 = vmatprep.subr.mxu0 %v314
          %360 = vmatpush2.msra.mxu0 %v313
          %361 = vmatprep.subr.mxu0 %v312
          %362 = vmatpush2.msra.mxu0 %v311
          %363 = vmatprep.subr.mxu0 %v310
          %364 = vmatpush2.msra.mxu0 %v309
          %365 = vmatprep.subr.mxu0 %v308
          %366 = vmatpush2.msra.mxu0 %v307
          %367 = vmatprep.subr.mxu0 %v306
          %368 = vmatpush2.msra.mxu0 %v305
          %369 = vmatprep.subr.mxu0 %v304
          %370 = vmatpush2.msra.mxu0 %v303
          %371 = vmatprep.subr.mxu0 %v302
          %372 = vmatpush2.msra.mxu0 %v301
          %373 = vmatprep.subr.mxu0 %v300
          %374 = vmatpush2.msra.mxu0 %v299
          %375 = vmatprep.subr.mxu0 %v298
          %376 = vmatpush2.msra.mxu0 %v297
          %377 = vmatprep.subr.mxu0 %v296
          %378 = vmatpush2.msra.mxu0 %v295
          %379 = vmatprep.subr.mxu0 %v294
          %380 = vmatpush2.msra.mxu0 %v293
          %381 = vmatprep.subr.mxu0 %v292
          %382 = vmatpush2.msra.mxu0 %v291
          %383 = vmatprep.subr.mxu0 %v290
          %384 = vmatpush2.msra.mxu0 %v289
          %385 = vmatprep.mubr.f32.mxu0 %v254
          %386 = vmatmul.mubr.f32.gmra.mxu0 %v253
          %v387 = vpop.f32.mrf.mxu0
          %v388 = vadd.f32 0.0, %v387
          %v389 = vpop.f32.mrf.mxu0
          %v390 = vadd.f32 0.0, %v389
          %391 = vmatprep.mubr.f32.mxu0 %v256
          %392 = vmatmul.mubr.f32.gmra.mxu0 %v255
          %v393 = vpop.f32.mrf.mxu0
          %v394 = vadd.f32 0.0, %v393
          %v395 = vpop.f32.mrf.mxu0
          %v396 = vadd.f32 0.0, %v395
          %397 = vdwg.mxu0
          %v398 = vld [vmem:[#allocation5] sm:$0xff]
          %v399 = vld [vmem:[#allocation5 + $0x8] sm:$0xff]
          %vm400 = vcmask 130048
          %v402 = vsel %vm400, %v398, 0
          %v405 = vsel %vm400, %v399, 0
          %407 = vmatprep.subr.mxu0 0.0
          %408 = vmatpush1.msra.mxu0 0.0
          %409 = vmatprep.subr.mxu0 0.0
          %410 = vmatpush1.msra.mxu0 0.0
          %411 = vmatprep.subr.mxu0 0.0
          %412 = vmatpush1.msra.mxu0 0.0
          %413 = vmatprep.subr.mxu0 0.0
          %414 = vmatpush1.msra.mxu0 0.0
          %415 = vmatprep.subr.mxu0 0.0
          %416 = vmatpush1.msra.mxu0 0.0
          %417 = vmatprep.subr.mxu0 0.0
          %418 = vmatpush1.msra.mxu0 0.0
          %419 = vmatprep.subr.mxu0 0.0
          %420 = vmatpush1.msra.mxu0 0.0
          %421 = vmatprep.subr.mxu0 0.0
          %422 = vmatpush1.msra.mxu0 0.0
          %423 = vmatprep.subr.mxu0 0.0
          %424 = vmatpush1.msra.mxu0 0.0
          %425 = vmatprep.subr.mxu0 0.0
          %426 = vmatpush1.msra.mxu0 0.0
          %427 = vmatprep.subr.mxu0 0.0
          %428 = vmatpush1.msra.mxu0 0.0
          %429 = vmatprep.subr.mxu0 0.0
          %430 = vmatpush1.msra.mxu0 0.0
          %431 = vmatprep.subr.mxu0 0.0
          %432 = vmatpush1.msra.mxu0 0.0
          %433 = vmatprep.subr.mxu0 0.0
          %434 = vmatpush1.msra.mxu0 0.0
          %435 = vmatprep.subr.mxu0 %v396
          %436 = vmatpush1.msra.mxu0 %v394
          %437 = vmatprep.subr.mxu0 %v390
          %438 = vmatpush1.msra.mxu0 %v388
          %439 = vmatprep.subr.mxu0 0.0
          %440 = vmatpush2.msra.mxu0 0.0
          %441 = vmatprep.subr.mxu0 0.0
          %442 = vmatpush2.msra.mxu0 0.0
          %443 = vmatprep.subr.mxu0 0.0
          %444 = vmatpush2.msra.mxu0 0.0
          %445 = vmatprep.subr.mxu0 0.0
          %446 = vmatpush2.msra.mxu0 0.0
          %447 = vmatprep.subr.mxu0 0.0
          %448 = vmatpush2.msra.mxu0 0.0
          %449 = vmatprep.subr.mxu0 0.0
          %450 = vmatpush2.msra.mxu0 0.0
          %451 = vmatprep.subr.mxu0 0.0
          %452 = vmatpush2.msra.mxu0 0.0
          %453 = vmatprep.subr.mxu0 0.0
          %454 = vmatpush2.msra.mxu0 0.0
          %455 = vmatprep.subr.mxu0 0.0
          %456 = vmatpush2.msra.mxu0 0.0
          %457 = vmatprep.subr.mxu0 0.0
          %458 = vmatpush2.msra.mxu0 0.0
          %459 = vmatprep.subr.mxu0 0.0
          %460 = vmatpush2.msra.mxu0 0.0
          %461 = vmatprep.subr.mxu0 0.0
          %462 = vmatpush2.msra.mxu0 0.0
          %463 = vmatprep.subr.mxu0 0.0
          %464 = vmatpush2.msra.mxu0 0.0
          %465 = vmatprep.subr.mxu0 0.0
          %466 = vmatpush2.msra.mxu0 0.0
          %467 = vmatprep.subr.mxu0 0.0
          %468 = vmatpush2.msra.mxu0 0.0
          %469 = vmatprep.subr.mxu0 0.0
          %470 = vmatpush2.msra.mxu0 0.0
          %471 = vmatprep.mubr.f32.mxu0 0.0
          %472 = vmatmul.mubr.f32.gmra.mxu0 %v402
          %v473 = vpop.f32.mrf.mxu0
          %v474 = vadd.f32 0.0, %v473
          %v475 = vpop.f32.mrf.mxu0
          %v476 = vadd.f32 0.0, %v475
          %477 = vmatprep.mubr.f32.mxu0 0.0
          %478 = vmatmul.mubr.f32.gmra.mxu0 %v405
          %v479 = vpop.f32.mrf.mxu0
          %v480 = vadd.f32 0.0, %v479
          %v481 = vpop.f32.mrf.mxu0
          %v482 = vadd.f32 0.0, %v481
          %483 = vdwg.mxu0
          %s484 = smul.u32 %s249, 4
          %s485 = smul.addr %s484, 8
          %s486 = scalar_lea.vmem %s239, %s485 [#allocation8]
          %487 = vst [vmem:[%s486] sm:$0xff] %v474
          %488 = vst [vmem:[%s486 + $0x8] sm:$0xff] %v476
          %489 = vst [vmem:[%s486 + $0x10] sm:$0xff] %v480
          %490 = vst [vmem:[%s486 + $0x18] sm:$0xff] %v482
        $region49: #{tpu_custom_call.1} parent=31 // loop_footer
          %s248 = sadd.s32 1, %s244
        $region50: #{tpu_custom_call.1} parent=31 // loop_footer_branch
          %243 = sbr.rel target = $region46
        $region51: #{tpu_custom_call.1} parent=31 // loop_exit
          _
        %s491 = sand.u32 %s115, 1
        %s492 = scalar_lea.sflag [#allocation4], %s491
        %s493 = sand.u32 %s115, 1
        %s494 = smul.addr %s493, 512
        %s495 = scalar_lea.vmem [#allocation8], %s494
        // Predicated region
        $region52: #{tpu_custom_call.1} parent=31 // pred_check
          %p496 = pneg %p125
        $region53: #{tpu_custom_call.1} parent=31 // pred_check_branch
          %498 = sbr.rel (%p496) target = $region55
        $region54: #{tpu_custom_call.1} parent=31 // pred_region
          %s499 = smul.u32 16, %s26
          %s501 = ssub.s32 8192, 8192
          %502 = vsyncadd %s492, %s501
          %s503 = smul.addr %s499, 4
          %s504 = smul.addr %s25, 64
          %s505 = sadd.s32 %s503, %s504
          %s506 = smul.addr %s505, 128
          %s507 = scalar_lea.hbm %s3, %s506
          %s508 = sshll.u32 %s495, 4
          %s509 = int_to_ptr.vmem [resolvable:$true] %s508
          %514 = dma.vmem_to_hbm [thread:$0]  %s509, 8192, %s507, %s492, 256, 256, 16
        $region55: #{tpu_custom_call.1} parent=31 // pred_fallthru
          _
      $region32: #{tpu_custom_call.1} parent=5 // pred_fallthru
        _
      %p515 = scmp.le.s32.totalorder 2, %s16
      // Predicated region
      $region56: #{tpu_custom_call.1} parent=5 // pred_check
        %p516 = pneg %p515
      $region57: #{tpu_custom_call.1} parent=5 // pred_check_branch
        %518 = sbr.rel (%p516) target = $region59
      $region58: #{tpu_custom_call.1} parent=5 // pred_region
        %s519 = ssub.s32 %s16, 2
        // Predicated region
        $region60: #{tpu_custom_call.1} parent=58 // pred_check
          %p520 = pneg %p131
        $region61: #{tpu_custom_call.1} parent=58 // pred_check_branch
          %522 = sbr.rel (%p520) target = $region63
        $region62: #{tpu_custom_call.1} parent=58 // pred_region
          %s523 = sand.u32 %s116, 1
          %s524 = scalar_lea.sflag [#allocation4], %s523
          %s525 = sand.u32 %s116, 1
          %s526 = smul.addr %s525, 512
          %s527 = scalar_lea.vmem [#allocation8], %s526
          %528 = dma.done %s524, 8192
        $region63: #{tpu_custom_call.1} parent=58 // pred_fallthru
          _
      $region59: #{tpu_custom_call.1} parent=5 // pred_fallthru
        _
    $region6: #{tpu_custom_call.1} parent=1 // loop_footer
      %s20 = sadd.s32 1, %s16
    $region7: #{tpu_custom_call.1} parent=1 // loop_footer_branch
      %15 = sbr.rel target = $region3
    $region8: #{tpu_custom_call.1} parent=1 // loop_exit
      _
    %529 = vsyncpa [#allocation3], 1
    %s530 = scalar_lea.sflag [#allocation3], 1
    %531 = vsyncpa %s530, 1
    %532 = vsyncpa [#allocation6], 1
    %533 = vsyncpa [#allocation4], 1
    %s534 = scalar_lea.sflag [#allocation4], 1
    %535 = vsyncpa %s534, 1

</llo_original>
